<compile_context>
chip_gen: v5e
topology: v5e:2x2
jax: 0.10.0
libtpu: 0.0.40
codegen_flags: <defaults>
</compile_context>

<pallas_src>
import functools
import math

import jax
import jax.numpy as jnp
from jax.experimental import pallas as pl
from jax.experimental.pallas import tpu as pltpu

_HALF_LOG_2PI = 0.5 * math.log(2.0 * math.pi)


def _round_up(x, m):
    return ((x + m - 1) // m) * m


def _actor_kernel(obs_ref,             # (tb, obs_dim)
                  noise_ref,           # (tb, act_dim)  eps ~ N(0, 1)
                  w1_ref, b1_ref, w2_ref, b2_ref, w3_ref, b3_ref,
                  logstd_ref,          # (1, act_dim)
                  act_ref,             # out: (tb, act_dim)
                  logp_ref,            # out: (tb, 1)
                  *, act_dim):
    obs = obs_ref[...]

    # mu_net: Linear -> Tanh -> Linear -> Tanh -> Linear (identity head)
    h1 = jnp.tanh(
        jnp.dot(obs, w1_ref[...], preferred_element_type=jnp.float32)
        + b1_ref[...])
    h2 = jnp.tanh(
        jnp.dot(h1, w2_ref[...], preferred_element_type=jnp.float32)
        + b2_ref[...])
    mu = (jnp.dot(h2, w3_ref[...], preferred_element_type=jnp.float32)
          + b3_ref[...])                                    # (tb, act_dim)

    log_std = logstd_ref[...]                               # (1, act_dim)
    std = jnp.exp(log_std)

    # dist.sample() == mu + std * eps
    eps = noise_ref[...]
    act = mu + std * eps

    # sum_i Normal.log_prob(act)_i
    #   = -0.5 * sum(eps^2) - (sum(log_std) + act_dim * 0.5 * log(2*pi))
    const = jnp.sum(log_std) + act_dim * _HALF_LOG_2PI
    logp = -0.5 * jnp.sum(eps * eps, axis=-1, keepdims=True) - const

    # Direct stores to the two slim outputs (no padded slab, no concat temp).
    act_ref[...] = act
    logp_ref[...] = logp


def mlp_gaussian_actor_forward(obs, params, seed, *, batch_tile=4096):
    """Forward pass matching torch: returns (act [B, act_dim], log_prob [B])."""
    w1, b1, w2, b2, w3, b3, log_std = params
    B, obs_dim = obs.shape
    act_dim = w3.shape[1]

    # Batch tiling: tile rows must be a multiple of 8 sublanes.
    b8 = _round_up(B, 8)
    tb = min(batch_tile, b8)
    # v7x megacore: ensure >=2 grid steps whenever the batch allows it so the
    # "parallel" batch axis shards across both TensorCores.
    if b8 // tb < 2 and b8 >= 16:
        tb = _round_up((b8 + 1) // 2, 8)
    b_pad = _round_up(B, tb)

    if b_pad != B:
        obs = jnp.pad(obs, ((0, b_pad - B), (0, 0)))

    # Gaussian noise generated host-side (TPU-PRNG in-kernel primitives are not
    # available on every lowering path); tiny (act_dim*4 B/row) input stream.
    noise = jax.random.normal(jax.random.PRNGKey(seed), (b_pad, act_dim),
                              dtype=jnp.float32)

    grid = (b_pad // tb,)
    kernel = functools.partial(_actor_kernel, act_dim=act_dim)

    act, logp = pl.pallas_call(
        kernel,
        out_shape=(
            jax.ShapeDtypeStruct((b_pad, act_dim), jnp.float32),
            jax.ShapeDtypeStruct((b_pad, 1), jnp.float32),
        ),
        grid_spec=pltpu.PrefetchScalarGridSpec(
            num_scalar_prefetch=0,
            grid=grid,
            in_specs=[
                # Streamed over the batch grid.
                pl.BlockSpec((tb, obs_dim), lambda i: (i, 0)),
                pl.BlockSpec((tb, act_dim), lambda i: (i, 0)),
                # Weights / biases / log_std: constant index_map -> fetched
                # once, VMEM-resident across all grid steps.
                pl.BlockSpec(w1.shape, lambda i: (0, 0)),
                pl.BlockSpec(b1.shape, lambda i: (0, 0)),
                pl.BlockSpec(w2.shape, lambda i: (0, 0)),
                pl.BlockSpec(b2.shape, lambda i: (0, 0)),
                pl.BlockSpec(w3.shape, lambda i: (0, 0)),
                pl.BlockSpec(b3.shape, lambda i: (0, 0)),
                pl.BlockSpec(log_std.shape, lambda i: (0, 0)),
            ],
            out_specs=(
                pl.BlockSpec((tb, act_dim), lambda i: (i, 0)),
                pl.BlockSpec((tb, 1), lambda i: (i, 0)),
            ),
        ),
        compiler_params=pltpu.CompilerParams(
            dimension_semantics=("parallel",)),   # megacore split on v7x
    )(obs, noise, w1, b1, w2, b2, w3, b3, log_std)

    return act[:B], logp[:B, 0]


def init_params(key, obs_dim, hidden_sizes, act_dim):
    """PyTorch-Linear-style init (uniform +-1/sqrt(fan_in)); log_std = -0.5."""
    sizes = [obs_dim] + list(hidden_sizes) + [act_dim]
    params = []
    for i in range(len(sizes) - 1):
        fan_in, fan_out = sizes[i], sizes[i + 1]
        key, kw, kb = jax.random.split(key, 3)
        bound = 1.0 / math.sqrt(fan_in)
        w = jax.random.uniform(kw, (fan_in, fan_out), jnp.float32, -bound, bound)
        b = jax.random.uniform(kb, (1, fan_out), jnp.float32, -bound, bound)
        params.extend([w, b])
    log_std = jnp.full((1, act_dim), -0.5, dtype=jnp.float32)
    params.append(log_std)
    return tuple(params)


def _mu_reference(obs, params):
    w1, b1, w2, b2, w3, b3, _ = params
    h1 = jnp.tanh(obs @ w1 + b1)
    h2 = jnp.tanh(h1 @ w2 + b2)
    return h2 @ w3 + b3


if __name__ == "__main__":
    obs_dim, act_dim = 16, 8
    hidden_sizes = (32, 32)
    batch = 8

    key = jax.random.PRNGKey(0)
    key, k_obs, k_params = jax.random.split(key, 3)

    params = init_params(k_params, obs_dim, hidden_sizes, act_dim)
    obs = jax.random.normal(k_obs, (batch, obs_dim), dtype=jnp.float32)

    act, log_prob = mlp_gaussian_actor_forward(obs, params, seed=1234)
    jax.block_until_ready((act, log_prob))

    assert act.shape == (batch, act_dim)
    assert log_prob.shape == (batch,)
    assert bool(jnp.isfinite(act).all()) and bool(jnp.isfinite(log_prob).all())

    # Self-consistency vs a pure-JAX reference of the deterministic part:
    # recover eps from the sampled action and recheck the summed log_prob.
    log_std = params[-1]
    std = jnp.exp(log_std)
    mu_ref = _mu_reference(obs, params)
    eps = (act - mu_ref) / std
    logp_ref = (-0.5 * jnp.sum(eps * eps, axis=-1)
                - jnp.sum(log_std) - act_dim * _HALF_LOG_2PI)
    assert bool(jnp.max(jnp.abs(log_prob - logp_ref)) < 1e-2), (
        "log_prob mismatch vs reference")

    print("KERNEL_OK")
</pallas_src>

<mosaic_0001>
module attributes {stable_mosaic.version = 11 : i64} {
  func.func @_actor_kernel(%arg0: i32, %arg1: memref<8x16xf32, #tpu.memory_space<vmem>>, %arg2: memref<8x8xf32, #tpu.memory_space<vmem>>, %arg3: memref<16x32xf32, #tpu.memory_space<vmem>>, %arg4: memref<1x32xf32, #tpu.memory_space<vmem>>, %arg5: memref<32x32xf32, #tpu.memory_space<vmem>>, %arg6: memref<1x32xf32, #tpu.memory_space<vmem>>, %arg7: memref<32x8xf32, #tpu.memory_space<vmem>>, %arg8: memref<1x8xf32, #tpu.memory_space<vmem>>, %arg9: memref<1x8xf32, #tpu.memory_space<vmem>>, %arg10: memref<8x8xf32, #tpu.memory_space<vmem>>, %arg11: memref<8x1xf32, #tpu.memory_space<vmem>>) attributes {dimension_semantics = [#tpu.dimension_semantics<parallel>], iteration_bounds = array<i64: 1>, scalar_prefetch = 0 : i64, scratch_operands = 0 : i64, tpu.core_type = #tpu.core_type<tc>, window_params = [{transform_indices = @transform_0, window_bounds = array<i64: 8, 16>}, {transform_indices = @transform_1, window_bounds = array<i64: 8, 8>}, {pipeline_mode = #tpu.pipeline_mode<synchronous>, transform_indices = @transform_2, window_bounds = array<i64: 16, 32>}, {pipeline_mode = #tpu.pipeline_mode<synchronous>, transform_indices = @transform_3, window_bounds = array<i64: 1, 32>}, {pipeline_mode = #tpu.pipeline_mode<synchronous>, transform_indices = @transform_4, window_bounds = array<i64: 32, 32>}, {pipeline_mode = #tpu.pipeline_mode<synchronous>, transform_indices = @transform_5, window_bounds = array<i64: 1, 32>}, {pipeline_mode = #tpu.pipeline_mode<synchronous>, transform_indices = @transform_6, window_bounds = array<i64: 32, 8>}, {pipeline_mode = #tpu.pipeline_mode<synchronous>, transform_indices = @transform_7, window_bounds = array<i64: 1, 8>}, {pipeline_mode = #tpu.pipeline_mode<synchronous>, transform_indices = @transform_8, window_bounds = array<i64: 1, 8>}, {transform_indices = @transform_9, window_bounds = array<i64: 8, 8>}, {transform_indices = @transform_10, window_bounds = array<i64: 8, 1>}]} {
    %c0 = arith.constant 0 : index
    %c0_0 = arith.constant 0 : index
    %0 = vector.load %arg1[%c0, %c0_0] : memref<8x16xf32, #tpu.memory_space<vmem>>, vector<8x16xf32>
    %c0_1 = arith.constant 0 : index
    %c0_2 = arith.constant 0 : index
    %1 = vector.load %arg3[%c0_1, %c0_2] : memref<16x32xf32, #tpu.memory_space<vmem>>, vector<16x32xf32>
    %cst = arith.constant dense<0.000000e+00> : vector<8x32xf32>
    %2 = tpu.matmul %0, %1, %cst {dimension_numbers = #tpu.dot_dimension_numbers<[1], [0], [0], [1], [0, 0, 1, 1], [], []>} : vector<8x16xf32>, vector<16x32xf32>, vector<8x32xf32> -> vector<8x32xf32>
    %c0_3 = arith.constant 0 : index
    %c0_4 = arith.constant 0 : index
    %3 = vector.load %arg4[%c0_3, %c0_4] : memref<1x32xf32, #tpu.memory_space<vmem>>, vector<1x32xf32>
    %4 = vector.broadcast %3 : vector<1x32xf32> to vector<8x32xf32>
    %5 = arith.addf %2, %4 : vector<8x32xf32>
    %6 = math.tanh %5 : vector<8x32xf32>
    %c0_5 = arith.constant 0 : index
    %c0_6 = arith.constant 0 : index
    %7 = vector.load %arg5[%c0_5, %c0_6] : memref<32x32xf32, #tpu.memory_space<vmem>>, vector<32x32xf32>
    %cst_7 = arith.constant dense<0.000000e+00> : vector<8x32xf32>
    %8 = tpu.matmul %6, %7, %cst_7 {dimension_numbers = #tpu.dot_dimension_numbers<[1], [0], [0], [1], [0, 0, 1, 1], [], []>} : vector<8x32xf32>, vector<32x32xf32>, vector<8x32xf32> -> vector<8x32xf32>
    %c0_8 = arith.constant 0 : index
    %c0_9 = arith.constant 0 : index
    %9 = vector.load %arg6[%c0_8, %c0_9] : memref<1x32xf32, #tpu.memory_space<vmem>>, vector<1x32xf32>
    %10 = vector.broadcast %9 : vector<1x32xf32> to vector<8x32xf32>
    %11 = arith.addf %8, %10 : vector<8x32xf32>
    %12 = math.tanh %11 : vector<8x32xf32>
    %c0_10 = arith.constant 0 : index
    %c0_11 = arith.constant 0 : index
    %13 = vector.load %arg7[%c0_10, %c0_11] : memref<32x8xf32, #tpu.memory_space<vmem>>, vector<32x8xf32>
    %cst_12 = arith.constant dense<0.000000e+00> : vector<8x8xf32>
    %14 = tpu.matmul %12, %13, %cst_12 {dimension_numbers = #tpu.dot_dimension_numbers<[1], [0], [0], [1], [0, 0, 1, 1], [], []>} : vector<8x32xf32>, vector<32x8xf32>, vector<8x8xf32> -> vector<8x8xf32>
    %c0_13 = arith.constant 0 : index
    %c0_14 = arith.constant 0 : index
    %15 = vector.load %arg8[%c0_13, %c0_14] : memref<1x8xf32, #tpu.memory_space<vmem>>, vector<1x8xf32>
    %16 = vector.broadcast %15 : vector<1x8xf32> to vector<8x8xf32>
    %17 = arith.addf %14, %16 : vector<8x8xf32>
    %c0_15 = arith.constant 0 : index
    %c0_16 = arith.constant 0 : index
    %18 = vector.load %arg9[%c0_15, %c0_16] : memref<1x8xf32, #tpu.memory_space<vmem>>, vector<1x8xf32>
    %19 = math.exp %18 : vector<1x8xf32>
    %c0_17 = arith.constant 0 : index
    %c0_18 = arith.constant 0 : index
    %20 = vector.load %arg2[%c0_17, %c0_18] : memref<8x8xf32, #tpu.memory_space<vmem>>, vector<8x8xf32>
    %21 = vector.broadcast %19 : vector<1x8xf32> to vector<8x8xf32>
    %22 = arith.mulf %21, %20 : vector<8x8xf32>
    %23 = arith.addf %17, %22 : vector<8x8xf32>
    %24 = vector.shape_cast %18 : vector<1x8xf32> to vector<1x1x8xf32>
    %cst_19 = arith.constant dense<0.000000e+00> : vector<1xf32>
    %25 = vector.multi_reduction <add>, %24, %cst_19 [1, 2] : vector<1x1x8xf32> to vector<1xf32>
    %26 = vector.shape_cast %25 : vector<1xf32> to vector<1x1x1xf32>
    %27 = vector.extract %26[0, 0, 0] : f32 from vector<1x1x1xf32>
    %cst_20 = arith.constant 7.35150814 : f32
    %28 = arith.addf %27, %cst_20 : f32
    %29 = arith.mulf %20, %20 : vector<8x8xf32>
    %cst_21 = arith.constant dense<0.000000e+00> : vector<8xf32>
    %30 = vector.multi_reduction <add>, %29, %cst_21 [1] : vector<8x8xf32> to vector<8xf32>
    %31 = vector.shape_cast %30 : vector<8xf32> to vector<8x1xf32>
    %cst_22 = arith.constant -5.000000e-01 : f32
    %32 = vector.broadcast %cst_22 : f32 to vector<8x1xf32>
    %33 = arith.mulf %32, %31 : vector<8x1xf32>
    %34 = vector.broadcast %28 : f32 to vector<8x1xf32>
    %35 = arith.subf %33, %34 : vector<8x1xf32>
    %c0_23 = arith.constant 0 : index
    %c0_24 = arith.constant 0 : index
    %36 = vector.load %arg10[%c0_23, %c0_24] : memref<8x8xf32, #tpu.memory_space<vmem>>, vector<8x8xf32>
    tpu.vector_store %arg10[%c0_23, %c0_24], %23 {strides = array<i32>} : memref<8x8xf32, #tpu.memory_space<vmem>>, vector<8x8xf32>,
    %c0_25 = arith.constant 0 : index
    %c0_26 = arith.constant 0 : index
    %37 = vector.load %arg11[%c0_25, %c0_26] : memref<8x1xf32, #tpu.memory_space<vmem>>, vector<8x1xf32>
    tpu.vector_store %arg11[%c0_25, %c0_26], %35 {strides = array<i32>} : memref<8x1xf32, #tpu.memory_space<vmem>>, vector<8x1xf32>,
    return
  }
  func.func @transform_0(%arg0: i32) -> (i32, i32) {
    %c0_i32 = arith.constant 0 : i32
    %c0_i32_0 = arith.constant 0 : i32
    return %arg0, %c0_i32 : i32, i32
  }
  func.func @transform_1(%arg0: i32) -> (i32, i32) {
    %c0_i32 = arith.constant 0 : i32
    %c0_i32_0 = arith.constant 0 : i32
    return %arg0, %c0_i32 : i32, i32
  }
  func.func @transform_2(%arg0: i32) -> (i32, i32) {
    %c0_i32 = arith.constant 0 : i32
    %c0_i32_0 = arith.constant 0 : i32
    %c0_i32_1 = arith.constant 0 : i32
    return %c0_i32, %c0_i32_0 : i32, i32
  }
  func.func @transform_3(%arg0: i32) -> (i32, i32) {
    %c0_i32 = arith.constant 0 : i32
    %c0_i32_0 = arith.constant 0 : i32
    %c0_i32_1 = arith.constant 0 : i32
    return %c0_i32, %c0_i32_0 : i32, i32
  }
  func.func @transform_4(%arg0: i32) -> (i32, i32) {
    %c0_i32 = arith.constant 0 : i32
    %c0_i32_0 = arith.constant 0 : i32
    %c0_i32_1 = arith.constant 0 : i32
    return %c0_i32, %c0_i32_0 : i32, i32
  }
  func.func @transform_5(%arg0: i32) -> (i32, i32) {
    %c0_i32 = arith.constant 0 : i32
    %c0_i32_0 = arith.constant 0 : i32
    %c0_i32_1 = arith.constant 0 : i32
    return %c0_i32, %c0_i32_0 : i32, i32
  }
  func.func @transform_6(%arg0: i32) -> (i32, i32) {
    %c0_i32 = arith.constant 0 : i32
    %c0_i32_0 = arith.constant 0 : i32
    %c0_i32_1 = arith.constant 0 : i32
    return %c0_i32, %c0_i32_0 : i32, i32
  }
  func.func @transform_7(%arg0: i32) -> (i32, i32) {
    %c0_i32 = arith.constant 0 : i32
    %c0_i32_0 = arith.constant 0 : i32
    %c0_i32_1 = arith.constant 0 : i32
    return %c0_i32, %c0_i32_0 : i32, i32
  }
  func.func @transform_8(%arg0: i32) -> (i32, i32) {
    %c0_i32 = arith.constant 0 : i32
    %c0_i32_0 = arith.constant 0 : i32
    %c0_i32_1 = arith.constant 0 : i32
    return %c0_i32, %c0_i32_0 : i32, i32
  }
  func.func @transform_9(%arg0: i32) -> (i32, i32) {
    %c0_i32 = arith.constant 0 : i32
    %c0_i32_0 = arith.constant 0 : i32
    return %arg0, %c0_i32 : i32, i32
  }
  func.func @transform_10(%arg0: i32) -> (i32, i32) {
    %c0_i32 = arith.constant 0 : i32
    %c0_i32_0 = arith.constant 0 : i32
    return %arg0, %c0_i32 : i32, i32
  }
}

</mosaic_0001>

<llo_original>
// kernel: tpu_custom_call.1
$region0: #{tpu_custom_call.1}
  #allocation0 [shape = 'u32[]', space=smem, size = 0x4, offset = 0x4, fixed_abs, tag = 'smem constant byte address 0x4 - core index']
  #allocation1 [shape = 'u32[72,128]{1,0:T(1,128)}', space=vmem, size = 0x9000, scoped, tag = 'internal scratch']
  %s0 = inlined_call_operand.vmem [shape: f32[8,16], index: 0, kind: input, shape index: {}]
  %s1 = inlined_call_operand.hbm [shape: f32[8,8], index: 1, kind: input, shape index: {}]
  %s2 = inlined_call_operand.hbm [shape: f32[16,32], index: 2, kind: input, shape index: {}]
  %s3 = inlined_call_operand.vmem [shape: f32[1,32], index: 3, kind: input, shape index: {}]
  %s4 = inlined_call_operand.vmem [shape: f32[32,32], index: 4, kind: input, shape index: {}]
  %s5 = inlined_call_operand.vmem [shape: f32[1,32], index: 5, kind: input, shape index: {}]
  %s6 = inlined_call_operand.vmem [shape: f32[32,8], index: 6, kind: input, shape index: {}]
  %s7 = inlined_call_operand.vmem [shape: f32[1,8], index: 7, kind: input, shape index: {}]
  %s8 = inlined_call_operand.vmem [shape: f32[1,8], index: 8, kind: input, shape index: {}]
  %s9 = inlined_call_operand.hbm [shape: f32[8,8], index: 9, kind: output, shape index: {0}]
  %s10 = inlined_call_operand.vmem [shape: f32[8,1], index: 10, kind: output, shape index: {1}]
  %11 = xla_tuple %s9, %s10
  %s12 = sld [smem:[#allocation0]]
  $region62: #{tpu_custom_call.1} parent=0
    _
  %s14 = ssub.s32 1, %s12
  %s15 = scalar_select 0, %s14, %s12
  $region1: #{tpu_custom_call.1} parent=0
    #allocation2 [shape = 'u8[4096]{0}', space=vmem, size = 0x1000, scoped, tag = 'input window, operand 1, single buffered']
    #allocation3 [shape = 's32[1]{0}', space=sflag, size = 0x4, scoped, tag = 'scoped memory for tpu_custom_call.1']
    #allocation4 [shape = 's32[1]{0}', space=sflag, size = 0x4, scoped, tag = 'scoped memory for tpu_custom_call.1']
    #allocation5 [shape = 'u8[8192]{0}', space=vmem, size = 0x2000, scoped, tag = 'input window, operand 2, single buffered']
    #allocation6 [shape = 's32[1]{0}', space=sflag, size = 0x4, scoped, tag = 'scoped memory for tpu_custom_call.1']
    #allocation7 [shape = 'u8[4096]{0}', space=vmem, size = 0x1000, scoped, tag = 'output window, operand 0, single buffered']
    %16 = vsyncpa [#allocation3], 0
    %17 = vsyncpa [#allocation6], 0
    %18 = vsyncpa [#allocation4], 0
    // Predicated region
    $region2: #{tpu_custom_call.1} parent=1 // pred_check
      _
    $region3: #{tpu_custom_call.1} parent=1 // pred_check_branch
      %20 = sbr.rel (0) target = $region5
    $region4: #{tpu_custom_call.1} parent=1 // pred_region
      _
    $region5: #{tpu_custom_call.1} parent=1 // pred_fallthru
      _
    // Predicated region
    $region6: #{tpu_custom_call.1} parent=1 // pred_check
      _
    $region7: #{tpu_custom_call.1} parent=1 // pred_check_branch
      %22 = sbr.rel (0) target = $region9
    $region8: #{tpu_custom_call.1} parent=1 // pred_region
      %24 = vsyncadd [#allocation3], 0
      %s26 = sshll.u32 %s1, 4
      %s27 = int_to_ptr.hbm [resolvable:$true] %s26
      %s28 = sshll.u32 [#allocation2], 4
      %s29 = int_to_ptr.vmem [resolvable:$true] %s28
      %31 = dma.hbm_to_vmem [thread:$0]  %s27, 128, %s29, [#allocation3]
    $region9: #{tpu_custom_call.1} parent=1 // pred_fallthru
      _
    // Predicated region
    $region10: #{tpu_custom_call.1} parent=1 // pred_check
      _
    $region11: #{tpu_custom_call.1} parent=1 // pred_check_branch
      %33 = sbr.rel (0) target = $region13
    $region12: #{tpu_custom_call.1} parent=1 // pred_region
      %35 = vsyncadd [#allocation6], 0
      %s36 = sshll.u32 %s2, 4
      %s37 = int_to_ptr.hbm [resolvable:$true] %s36
      %s38 = sshll.u32 [#allocation5], 4
      %s39 = int_to_ptr.vmem [resolvable:$true] %s38
      %44 = dma.hbm_to_vmem [thread:$0]  %s37, 256, %s39, [#allocation6], 128, 128, 8
    $region13: #{tpu_custom_call.1} parent=1 // pred_fallthru
      _
    // Predicated region
    $region14: #{tpu_custom_call.1} parent=1 // pred_check
      _
    $region15: #{tpu_custom_call.1} parent=1 // pred_check_branch
      %46 = sbr.rel (0) target = $region17
    $region16: #{tpu_custom_call.1} parent=1 // pred_region
      _
    $region17: #{tpu_custom_call.1} parent=1 // pred_fallthru
      _
    // Predicated region
    $region18: #{tpu_custom_call.1} parent=1 // pred_check
      _
    $region19: #{tpu_custom_call.1} parent=1 // pred_check_branch
      %48 = sbr.rel (0) target = $region21
    $region20: #{tpu_custom_call.1} parent=1 // pred_region
      _
    $region21: #{tpu_custom_call.1} parent=1 // pred_fallthru
      _
    // Predicated region
    $region22: #{tpu_custom_call.1} parent=1 // pred_check
      _
    $region23: #{tpu_custom_call.1} parent=1 // pred_check_branch
      %50 = sbr.rel (0) target = $region25
    $region24: #{tpu_custom_call.1} parent=1 // pred_region
      _
    $region25: #{tpu_custom_call.1} parent=1 // pred_fallthru
      _
    // Predicated region
    $region26: #{tpu_custom_call.1} parent=1 // pred_check
      _
    $region27: #{tpu_custom_call.1} parent=1 // pred_check_branch
      %52 = sbr.rel (0) target = $region29
    $region28: #{tpu_custom_call.1} parent=1 // pred_region
      _
    $region29: #{tpu_custom_call.1} parent=1 // pred_fallthru
      _
    // Predicated region
    $region30: #{tpu_custom_call.1} parent=1 // pred_check
      _
    $region31: #{tpu_custom_call.1} parent=1 // pred_check_branch
      %54 = sbr.rel (0) target = $region33
    $region32: #{tpu_custom_call.1} parent=1 // pred_region
      _
    $region33: #{tpu_custom_call.1} parent=1 // pred_fallthru
      _
    // Predicated region
    $region34: #{tpu_custom_call.1} parent=1 // pred_check
      _
    $region35: #{tpu_custom_call.1} parent=1 // pred_check_branch
      %56 = sbr.rel (0) target = $region37
    $region36: #{tpu_custom_call.1} parent=1 // pred_region
      _
    $region37: #{tpu_custom_call.1} parent=1 // pred_fallthru
      _
    // Predicated region
    $region38: #{tpu_custom_call.1} parent=1 // pred_check
      _
    $region39: #{tpu_custom_call.1} parent=1 // pred_check_branch
      %58 = sbr.rel (0) target = $region41
    $region40: #{tpu_custom_call.1} parent=1 // pred_region
      %60 = dma.done [#allocation3], 128
    $region41: #{tpu_custom_call.1} parent=1 // pred_fallthru
      _
    // Predicated region
    $region42: #{tpu_custom_call.1} parent=1 // pred_check
      _
    $region43: #{tpu_custom_call.1} parent=1 // pred_check_branch
      %62 = sbr.rel (0) target = $region45
    $region44: #{tpu_custom_call.1} parent=1 // pred_region
      %64 = dma.done [#allocation6], 256
    $region45: #{tpu_custom_call.1} parent=1 // pred_fallthru
      _
    %v65 = vld [vmem:[%s0] sm:$0xff]
    %v66 = vld [vmem:[#allocation5] sm:$0xff]
    %v67 = vld [vmem:[#allocation5 + $0x8] sm:$0xff]
    %v68 = vld [vmem:[%s3] sm:$0x1]
    %v70 = vperm.slane %v68, 0
    %vm72 = vcmask 130048
    %v74 = vsel %vm72, %v65, 0
    %76 = vmatpush.msra.mxu0 0.0
    %77 = vmatpush.msra.mxu0 0.0
    %78 = vmatpush.msra.mxu0 0.0
    %79 = vmatpush.msra.mxu0 0.0
    %80 = vmatpush.msra.mxu0 0.0
    %81 = vmatpush.msra.mxu0 0.0
    %82 = vmatpush.msra.mxu0 0.0
    %83 = vmatpush.msra.mxu0 0.0
    %84 = vmatpush.msra.mxu0 0.0
    %85 = vmatpush.msra.mxu0 0.0
    %86 = vmatpush.msra.mxu0 0.0
    %87 = vmatpush.msra.mxu0 0.0
    %88 = vmatpush.msra.mxu0 0.0
    %89 = vmatpush.msra.mxu0 0.0
    %90 = vmatpush.msra.mxu0 %v67
    %91 = vmatpush.msra.mxu0 %v66
    %92 = vmatmul.f32.gmra.mxu0 %v74
    %v93 = vpop.f32.mrf.mxu0
    %v94 = vadd.f32 %v70, %v93
    %95 = vdwg.mxu0
    %v96 = vtanh.pop %v94
    %v97 = vld [vmem:[%s4] sm:$0xff]
    %v98 = vld [vmem:[%s4 + $0x8] sm:$0xff]
    %v99 = vld [vmem:[%s4 + $0x10] sm:$0xff]
    %v100 = vld [vmem:[%s4 + $0x18] sm:$0xff]
    %v101 = vld [vmem:[%s5] sm:$0x1]
    %v103 = vperm.slane %v101, 0
    %vm105 = vcmask 261120
    %v107 = vsel %vm105, %v96, 0
    %109 = vmatpush.msra.mxu0 0.0
    %110 = vmatpush.msra.mxu0 0.0
    %111 = vmatpush.msra.mxu0 0.0
    %112 = vmatpush.msra.mxu0 0.0
    %113 = vmatpush.msra.mxu0 0.0
    %114 = vmatpush.msra.mxu0 0.0
    %115 = vmatpush.msra.mxu0 0.0
    %116 = vmatpush.msra.mxu0 0.0
    %117 = vmatpush.msra.mxu0 0.0
    %118 = vmatpush.msra.mxu0 0.0
    %119 = vmatpush.msra.mxu0 0.0
    %120 = vmatpush.msra.mxu0 0.0
    %121 = vmatpush.msra.mxu0 %v100
    %122 = vmatpush.msra.mxu0 %v99
    %123 = vmatpush.msra.mxu0 %v98
    %124 = vmatpush.msra.mxu0 %v97
    %125 = vmatmul.f32.gmra.mxu0 %v107
    %v126 = vpop.f32.mrf.mxu0
    %v127 = vadd.f32 %v103, %v126
    %128 = vdwg.mxu0
    %v129 = vtanh.pop %v127
    %v130 = vld [vmem:[%s6] sm:$0xff]
    %v131 = vld [vmem:[%s6 + $0x8] sm:$0xff]
    %v132 = vld [vmem:[%s6 + $0x10] sm:$0xff]
    %v133 = vld [vmem:[%s6 + $0x18] sm:$0xff]
    %v134 = vld [vmem:[%s7] sm:$0x1]
    %v136 = vperm.slane %v134, 0
    %v139 = vsel %vm105, %v129, 0
    %141 = vmatpush.msra.mxu0 0.0
    %142 = vmatpush.msra.mxu0 0.0
    %143 = vmatpush.msra.mxu0 0.0
    %144 = vmatpush.msra.mxu0 0.0
    %145 = vmatpush.msra.mxu0 0.0
    %146 = vmatpush.msra.mxu0 0.0
    %147 = vmatpush.msra.mxu0 0.0
    %148 = vmatpush.msra.mxu0 0.0
    %149 = vmatpush.msra.mxu0 0.0
    %150 = vmatpush.msra.mxu0 0.0
    %151 = vmatpush.msra.mxu0 0.0
    %152 = vmatpush.msra.mxu0 0.0
    %153 = vmatpush.msra.mxu0 %v133
    %154 = vmatpush.msra.mxu0 %v132
    %155 = vmatpush.msra.mxu0 %v131
    %156 = vmatpush.msra.mxu0 %v130
    %157 = vmatmul.f32.gmra.mxu0 %v139
    %v158 = vpop.f32.mrf.mxu0
    %v159 = vadd.f32 %v136, %v158
    %160 = vdwg.mxu0
    %v161 = vld [vmem:[%s8] sm:$0x1]
    %v162 = vmul.f32 %v161, 1.442695
    %v163 = vpow.pop %v162
    %v164 = vld [vmem:[#allocation2] sm:$0xff]
    %v166 = vperm.slane %v163, 0
    %v168 = vmul.f32 %v166, %v164
    %v169 = vadd.f32 %v159, %v168
    %vm170 = vcmask 57344
    %v171 = vsel %vm170, %v161, 0.0
    %172 = vadd.xlane.f32.xlu0 %v171
    %v173 = vpop.xlane.xlu0 %172
    %v174 = vrot.slane %v173, 4
    %v175 = vadd.f32 %v173, %v174
    %v176 = vrot.slane %v175, 2
    %v177 = vadd.f32 %v175, %v176
    %v178 = vrot.slane %v177, 1
    %v179 = vadd.f32 %v177, %v178
    %s180 = vtos %v179
    %s181 = sadd.f32 %s180, 7.351508
    %v182 = vmul.f32 %v164, %v164
    %vm183 = vcmask 64512
    %v184 = vsel %vm183, %v182, 0.0
    %185 = vadd.xlane.f32.xlu0 %v184
    %v186 = vpop.xlane.xlu0 %185
    %v187 = vmul.f32 %v186, -0.5
    %v188 = vstv %s181
    %v189 = vsub.f32 %v187, %v188
    %190 = vst.msk [vmem:[#allocation7] sm:$0xff] %vm183, %v169
    %vm191 = vcmask 7168
    %192 = vst.msk [vmem:[%s10] sm:$0xff] %vm191, %v189
    // Predicated region
    $region46: #{tpu_custom_call.1} parent=1 // pred_check
      _
    $region47: #{tpu_custom_call.1} parent=1 // pred_check_branch
      %194 = sbr.rel (0) target = $region49
    $region48: #{tpu_custom_call.1} parent=1 // pred_region
      %196 = vsyncadd [#allocation4], 0
      %s198 = sshll.u32 [#allocation7], 4
      %s199 = int_to_ptr.vmem [resolvable:$true] %s198
      %s200 = sshll.u32 %s9, 4
      %s201 = int_to_ptr.hbm [resolvable:$true] %s200
      %203 = dma.vmem_to_hbm [thread:$0]  %s199, 128, %s201, [#allocation4]
    $region49: #{tpu_custom_call.1} parent=1 // pred_fallthru
      _
    // Predicated region
    $region50: #{tpu_custom_call.1} parent=1 // pred_check
      _
    $region51: #{tpu_custom_call.1} parent=1 // pred_check_branch
      %205 = sbr.rel (0) target = $region53
    $region52: #{tpu_custom_call.1} parent=1 // pred_region
      _
    $region53: #{tpu_custom_call.1} parent=1 // pred_fallthru
      _
    // Predicated region
    $region54: #{tpu_custom_call.1} parent=1 // pred_check
      _
    $region55: #{tpu_custom_call.1} parent=1 // pred_check_branch
      %207 = sbr.rel (0) target = $region57
    $region56: #{tpu_custom_call.1} parent=1 // pred_region
      %209 = dma.done [#allocation4], 128
    $region57: #{tpu_custom_call.1} parent=1 // pred_fallthru
      _
    // Predicated region
    $region58: #{tpu_custom_call.1} parent=1 // pred_check
      _
    $region59: #{tpu_custom_call.1} parent=1 // pred_check_branch
      %211 = sbr.rel (0) target = $region61
    $region60: #{tpu_custom_call.1} parent=1 // pred_region
      _
    $region61: #{tpu_custom_call.1} parent=1 // pred_fallthru
      _
    %212 = vsyncpa [#allocation3], 1
    %213 = vsyncpa [#allocation6], 1
    %214 = vsyncpa [#allocation4], 1

</llo_original>
